<compile_context>
chip_gen: v7x
topology: tpu7x:2x2x1
jax: 0.10.0
libtpu: 0.0.40
codegen_flags: <defaults>
</compile_context>

<pallas_src>
import jax
import jax.numpy as jnp
from jax.experimental import pallas as pl
from jax.experimental.pallas import tpu as pltpu

OUT_LANES = 128  # lane-dense output slab width


def _round_up(v, m):
    return (v + m - 1) // m * m


def _leaky_relu(x, slope=0.2):
    return jnp.where(x > 0, x, slope * x)


def discriminator_kernel(x_ref, w1_ref, b1_ref, w2_ref, b2_ref, w3_ref, b3_ref, out_ref):
    """Fused MLP tile: (Linear -> LeakyReLU(0.2) -> Dropout_eval) x2 -> Linear(., 1).

    x_ref  : (TM, pacdim_p) bf16 VMEM    -- one row tile of the packed input
    w*_ref : bf16 VMEM,  b1/b2: f32 VMEM -- resident across grid steps (constant index_map)
    b3_ref : (1, 1) f32 SMEM             -- scalar final bias
    out_ref: (TM, OUT_LANES) f32 VMEM    -- lane-dense slab; the real logit is column 0
    """
    x = x_ref[...]

    # Layer 1: bf16 matmul, f32 accumulate / bias / LeakyReLU.
    h = jnp.dot(x, w1_ref[...], preferred_element_type=jnp.float32) + b1_ref[...]
    h = _leaky_relu(h).astype(jnp.bfloat16)

    # Layer 2.
    h = jnp.dot(h, w2_ref[...], preferred_element_type=jnp.float32) + b2_ref[...]
    h = _leaky_relu(h).astype(jnp.bfloat16)

    # Final projection into a 128-lane slab (w3 zero-padded) -> full unmasked stores.
    out_ref[...] = (
        jnp.dot(h, w3_ref[...], preferred_element_type=jnp.float32) + b3_ref[0, 0]
    )


def prepare_params(params, input_dim, pac=10):
    """Pad + cast the weights ONCE (hoisted out of the per-forward path).

    Zero padding is exact: padded K columns contribute 0, padded hidden units stay 0
    through LeakyReLU, padded output lanes are never read back.
    """
    w1, b1, w2, b2, w3, b3 = params
    pacdim = input_dim * pac
    h1, h2 = w1.shape[1], w2.shape[1]
    # 128-lane alignment. (CTGAN's production hidden=256 is already 256-aligned, i.e. the
    # full v6e/v7x MXU width; never shrink those tiles below 256.)
    pacdim_p = _round_up(pacdim, 128)
    h1_p = _round_up(h1, 128)
    h2_p = _round_up(h2, 128)

    w1p = jnp.pad(w1, ((0, pacdim_p - pacdim), (0, h1_p - h1))).astype(jnp.bfloat16)
    b1p = jnp.pad(b1, ((0, 0), (0, h1_p - h1))).astype(jnp.float32)
    w2p = jnp.pad(w2, ((0, h1_p - h1), (0, h2_p - h2))).astype(jnp.bfloat16)
    b2p = jnp.pad(b2, ((0, 0), (0, h2_p - h2))).astype(jnp.float32)
    w3p = jnp.pad(w3, ((0, h2_p - h2), (0, OUT_LANES - w3.shape[1]))).astype(jnp.bfloat16)
    b3s = b3.reshape(1, 1).astype(jnp.float32)

    return dict(
        w1=w1p, b1=b1p, w2=w2p, b2=b2p, w3=w3p, b3=b3s,
        pacdim=pacdim, pacdim_p=pacdim_p, h1_p=h1_p, h2_p=h2_p,
    )


def _build_call(n_p, tm, pacdim_p, h1_p, h2_p, single_buffer_weights):
    # Single-buffer the VMEM-resident weights/biases (constant index_map).
    wmode = {"pipeline_mode": pl.Buffered(1)} if single_buffer_weights else {}
    w_bufs = 1 if single_buffer_weights else 2

    # Explicit VMEM budget: x and out are double-buffered by the pipeline; weights use
    # w_bufs buffers; bias tiles pad to 8 sublanes in VMEM. Headroom x1.5 + 2 MiB,
    # floored at 16 MiB, capped at 64 MiB (v7x physical per-TC VMEM).
    vmem_est = (
        2 * tm * pacdim_p * 2                                               # x (bf16)
        + w_bufs * (pacdim_p * h1_p + h1_p * h2_p + h2_p * OUT_LANES) * 2   # weights (bf16)
        + w_bufs * 8 * (h1_p + h2_p) * 4                                    # biases (f32)
        + 2 * tm * OUT_LANES * 4                                            # out (f32)
    )
    vmem_limit = int(min(64 << 20, max(int(vmem_est * 1.5) + (2 << 20), 16 << 20)))

    flops = 2 * n_p * (pacdim_p * h1_p + h1_p * h2_p + h2_p * OUT_LANES)
    bytes_accessed = (
        n_p * pacdim_p * 2
        + (pacdim_p * h1_p + h1_p * h2_p + h2_p * OUT_LANES) * 2
        + (h1_p + h2_p + 1) * 4
        + n_p * OUT_LANES * 4
    )

    return pl.pallas_call(
        discriminator_kernel,
        out_shape=jax.ShapeDtypeStruct((n_p, OUT_LANES), jnp.float32),
        grid=(n_p // tm,),
        in_specs=[
            # x: tiled over rows -> double-buffered DMA overlaps compute.
            pl.BlockSpec((tm, pacdim_p), lambda i: (i, 0)),
            # weights / biases: full-array blocks, constant index_map -> VMEM resident.
            pl.BlockSpec((pacdim_p, h1_p), lambda i: (0, 0), **wmode),
            pl.BlockSpec((1, h1_p), lambda i: (0, 0), **wmode),
            pl.BlockSpec((h1_p, h2_p), lambda i: (0, 0), **wmode),
            pl.BlockSpec((1, h2_p), lambda i: (0, 0), **wmode),
            pl.BlockSpec((h2_p, OUT_LANES), lambda i: (0, 0), **wmode),
            # scalar final bias in SMEM (no padded VMEM tile for a single scalar).
            pl.BlockSpec(memory_space=pltpu.MemorySpace.SMEM),
        ],
        out_specs=pl.BlockSpec((tm, OUT_LANES), lambda i: (i, 0)),
        compiler_params=pltpu.CompilerParams(
            dimension_semantics=("parallel",),
            vmem_limit_bytes=vmem_limit,
        ),
        cost_estimate=pl.CostEstimate(
            flops=flops, transcendentals=0, bytes_accessed=bytes_accessed
        ),
    )


_USE_BUFFERED_WEIGHTS = True  # flipped off once if this Pallas build rejects Buffered(1)


def discriminator_forward(input_, prepared, pac=10, block_rows=256):
    """JAX wrapper mirroring Discriminator.forward (eval mode).

    `prepared` comes from prepare_params (weights pre-padded / pre-cast once).
    block_rows: sweep upward (512 / 1024) on v5e/v6e if VMEM allows; keep ~256 on v7x
    (64 MiB VMEM); drop to 128 on v5e if hitting the default scoped-VMEM limit.
    """
    global _USE_BUFFERED_WEIGHTS

    B, input_dim = input_.shape
    assert B % pac == 0
    pacdim = prepared["pacdim"]
    assert input_dim * pac == pacdim
    x = input_.reshape(-1, pacdim)  # == torch .view(-1, self.pacdim)
    n = x.shape[0]

    pacdim_p = prepared["pacdim_p"]
    h1_p = prepared["h1_p"]
    h2_p = prepared["h2_p"]

    # Row tile: multiple of 8; guarantee >= 2 grid steps when there are enough rows so the
    # "parallel" row axis actually shards across both v7x TensorCores.
    n8 = _round_up(max(n, 1), 8)
    tm = _round_up(min(block_rows, n8), 8)
    if n8 >= 16 and tm >= n8:
        tm = _round_up((n8 + 1) // 2, 8)
    n_p = _round_up(n, tm)

    # Skip the extra HBM pad pass over x when rows/features are already aligned.
    if n_p == n and pacdim_p == pacdim:
        xp = x.astype(jnp.bfloat16)
    else:
        xp = jnp.pad(x, ((0, n_p - n), (0, pacdim_p - pacdim))).astype(jnp.bfloat16)

    args = (xp, prepared["w1"], prepared["b1"], prepared["w2"], prepared["b2"],
            prepared["w3"], prepared["b3"])

    def run(single_buf):
        call = _build_call(n_p, tm, pacdim_p, h1_p, h2_p, single_buf)
        return jax.block_until_ready(call(*args))

    if _USE_BUFFERED_WEIGHTS:
        try:
            out_padded = run(True)
        except Exception:  # older Pallas builds without pipeline_mode=pl.Buffered(1)
            _USE_BUFFERED_WEIGHTS = False
            out_padded = run(False)
    else:
        out_padded = run(False)

    # Real rows, real logit column (column 0 of the lane-dense slab).
    return out_padded[:n, :1]


def init_params(key, input_dim, discriminator_dim, pac=10):
    """Deterministic parameter init (Kaiming-uniform-ish, like torch Linear default)."""
    dims = [input_dim * pac] + list(discriminator_dim) + [1]
    params = []
    for i in range(len(dims) - 1):
        fan_in, fan_out = dims[i], dims[i + 1]
        key, wk, bk = jax.random.split(key, 3)
        bound = 1.0 / jnp.sqrt(jnp.float32(fan_in))
        w = jax.random.uniform(wk, (fan_in, fan_out), jnp.float32, -bound, bound)
        b = jax.random.uniform(bk, (1, fan_out), jnp.float32, -bound, bound)
        params += [w, b]
    return tuple(params)


def reference_forward(input_, params, pac=10):
    """Pure-JAX f32 reference for correctness checking."""
    B, input_dim = input_.shape
    x = input_.reshape(-1, input_dim * pac)
    w1, b1, w2, b2, w3, b3 = params
    y1 = x @ w1 + b1
    h = jnp.where(y1 > 0, y1, 0.2 * y1)
    y2 = h @ w2 + b2
    h = jnp.where(y2 > 0, y2, 0.2 * y2)
    return h @ w3 + b3


if __name__ == "__main__":
    # Small shapes consistent with the module: pac=10, input_dim=16, two hidden layers of 32.
    pac = 10
    input_dim = 16
    discriminator_dim = (32, 32)
    batch = 2 * pac  # 20 rows -> 2 packed rows

    key = jax.random.PRNGKey(0)
    key, pkey, xkey = jax.random.split(key, 3)
    params = init_params(pkey, input_dim, discriminator_dim, pac=pac)
    prepared = prepare_params(params, input_dim, pac=pac)
    x = jax.random.normal(xkey, (batch, input_dim), jnp.float32)

    out = discriminator_forward(x, prepared, pac=pac)
    out = jax.block_until_ready(out)

    ref = reference_forward(x, params, pac=pac)
    assert out.shape == (batch // pac, 1), out.shape
    # bf16 MXU operands with f32 accumulation -> loosened tolerance vs the f32 reference.
    assert jnp.allclose(out, ref, atol=5e-2, rtol=5e-2), (out, ref)

    print("KERNEL_OK")
</pallas_src>

<mosaic_0001>
module attributes {stable_mosaic.version = 11 : i64} {
  func.func @discriminator_kernel(%arg0: i32, %arg1: memref<8x256xbf16, #tpu.memory_space<vmem>>, %arg2: memref<256x128xbf16, #tpu.memory_space<vmem>>, %arg3: memref<1x128xf32, #tpu.memory_space<vmem>>, %arg4: memref<128x128xbf16, #tpu.memory_space<vmem>>, %arg5: memref<1x128xf32, #tpu.memory_space<vmem>>, %arg6: memref<128x128xbf16, #tpu.memory_space<vmem>>, %arg7: memref<1x1xf32, #tpu.memory_space<smem>>, %arg8: memref<8x128xf32, #tpu.memory_space<vmem>>) attributes {dimension_semantics = [#tpu.dimension_semantics<parallel>], iteration_bounds = array<i64: 1>, scalar_prefetch = 0 : i64, scratch_operands = 0 : i64, tpu.core_type = #tpu.core_type<tc>, window_params = [{transform_indices = @transform_0, window_bounds = array<i64: 8, 256>}, {pipeline_mode = #tpu.pipeline_mode<synchronous>, transform_indices = @transform_1, window_bounds = array<i64: 256, 128>}, {pipeline_mode = #tpu.pipeline_mode<synchronous>, transform_indices = @transform_2, window_bounds = array<i64: 1, 128>}, {pipeline_mode = #tpu.pipeline_mode<synchronous>, transform_indices = @transform_3, window_bounds = array<i64: 128, 128>}, {pipeline_mode = #tpu.pipeline_mode<synchronous>, transform_indices = @transform_4, window_bounds = array<i64: 1, 128>}, {pipeline_mode = #tpu.pipeline_mode<synchronous>, transform_indices = @transform_5, window_bounds = array<i64: 128, 128>}, {transform_indices = @transform_6, window_bounds = array<i64: 1, 1>}, {transform_indices = @transform_7, window_bounds = array<i64: 8, 128>}]} {
    %c0 = arith.constant 0 : index
    %c0_0 = arith.constant 0 : index
    %0 = vector.load %arg1[%c0, %c0_0] : memref<8x256xbf16, #tpu.memory_space<vmem>>, vector<8x256xbf16>
    %c0_1 = arith.constant 0 : index
    %c0_2 = arith.constant 0 : index
    %1 = vector.load %arg2[%c0_1, %c0_2] : memref<256x128xbf16, #tpu.memory_space<vmem>>, vector<256x128xbf16>
    %cst = arith.constant dense<0.000000e+00> : vector<8x128xf32>
    %2 = tpu.matmul %0, %1, %cst {dimension_numbers = #tpu.dot_dimension_numbers<[1], [0], [0], [1], [0, 0, 1, 1], [], []>} : vector<8x256xbf16>, vector<256x128xbf16>, vector<8x128xf32> -> vector<8x128xf32>
    %c0_3 = arith.constant 0 : index
    %c0_4 = arith.constant 0 : index
    %3 = vector.load %arg3[%c0_3, %c0_4] : memref<1x128xf32, #tpu.memory_space<vmem>>, vector<1x128xf32>
    %4 = vector.broadcast %3 : vector<1x128xf32> to vector<8x128xf32>
    %5 = arith.addf %2, %4 : vector<8x128xf32>
    %cst_5 = arith.constant 0.000000e+00 : f32
    %6 = vector.broadcast %cst_5 : f32 to vector<8x128xf32>
    %7 = arith.cmpf ogt, %5, %6 : vector<8x128xf32>
    %cst_6 = arith.constant 2.000000e-01 : f32
    %8 = vector.broadcast %cst_6 : f32 to vector<8x128xf32>
    %9 = arith.mulf %8, %5 : vector<8x128xf32>
    %10 = arith.select %7, %5, %9 : vector<8x128xi1>, vector<8x128xf32>
    %11 = arith.truncf %10 : vector<8x128xf32> to vector<8x128xbf16>
    %c0_7 = arith.constant 0 : index
    %c0_8 = arith.constant 0 : index
    %12 = vector.load %arg4[%c0_7, %c0_8] : memref<128x128xbf16, #tpu.memory_space<vmem>>, vector<128x128xbf16>
    %cst_9 = arith.constant dense<0.000000e+00> : vector<8x128xf32>
    %13 = tpu.matmul %11, %12, %cst_9 {dimension_numbers = #tpu.dot_dimension_numbers<[1], [0], [0], [1], [0, 0, 1, 1], [], []>} : vector<8x128xbf16>, vector<128x128xbf16>, vector<8x128xf32> -> vector<8x128xf32>
    %c0_10 = arith.constant 0 : index
    %c0_11 = arith.constant 0 : index
    %14 = vector.load %arg5[%c0_10, %c0_11] : memref<1x128xf32, #tpu.memory_space<vmem>>, vector<1x128xf32>
    %15 = vector.broadcast %14 : vector<1x128xf32> to vector<8x128xf32>
    %16 = arith.addf %13, %15 : vector<8x128xf32>
    %cst_12 = arith.constant 0.000000e+00 : f32
    %17 = vector.broadcast %cst_12 : f32 to vector<8x128xf32>
    %18 = arith.cmpf ogt, %16, %17 : vector<8x128xf32>
    %cst_13 = arith.constant 2.000000e-01 : f32
    %19 = vector.broadcast %cst_13 : f32 to vector<8x128xf32>
    %20 = arith.mulf %19, %16 : vector<8x128xf32>
    %21 = arith.select %18, %16, %20 : vector<8x128xi1>, vector<8x128xf32>
    %22 = arith.truncf %21 : vector<8x128xf32> to vector<8x128xbf16>
    %c0_14 = arith.constant 0 : index
    %c0_15 = arith.constant 0 : index
    %23 = vector.load %arg6[%c0_14, %c0_15] : memref<128x128xbf16, #tpu.memory_space<vmem>>, vector<128x128xbf16>
    %cst_16 = arith.constant dense<0.000000e+00> : vector<8x128xf32>
    %24 = tpu.matmul %22, %23, %cst_16 {dimension_numbers = #tpu.dot_dimension_numbers<[1], [0], [0], [1], [0, 0, 1, 1], [], []>} : vector<8x128xbf16>, vector<128x128xbf16>, vector<8x128xf32> -> vector<8x128xf32>
    %c0_17 = arith.constant 0 : index
    %c0_18 = arith.constant 0 : index
    %25 = memref.load %arg7[%c0_17, %c0_18] : memref<1x1xf32, #tpu.memory_space<smem>>
    %26 = vector.broadcast %25 : f32 to vector<8x128xf32>
    %27 = arith.addf %24, %26 : vector<8x128xf32>
    %c0_19 = arith.constant 0 : index
    %c0_20 = arith.constant 0 : index
    %28 = vector.load %arg8[%c0_19, %c0_20] : memref<8x128xf32, #tpu.memory_space<vmem>>, vector<8x128xf32>
    tpu.vector_store %arg8[%c0_19, %c0_20], %27 {strides = array<i32>} : memref<8x128xf32, #tpu.memory_space<vmem>>, vector<8x128xf32>,
    return
  }
  func.func @transform_0(%arg0: i32) -> (i32, i32) {
    %c0_i32 = arith.constant 0 : i32
    %c0_i32_0 = arith.constant 0 : i32
    return %arg0, %c0_i32 : i32, i32
  }
  func.func @transform_1(%arg0: i32) -> (i32, i32) {
    %c0_i32 = arith.constant 0 : i32
    %c0_i32_0 = arith.constant 0 : i32
    %c0_i32_1 = arith.constant 0 : i32
    return %c0_i32, %c0_i32_0 : i32, i32
  }
  func.func @transform_2(%arg0: i32) -> (i32, i32) {
    %c0_i32 = arith.constant 0 : i32
    %c0_i32_0 = arith.constant 0 : i32
    %c0_i32_1 = arith.constant 0 : i32
    return %c0_i32, %c0_i32_0 : i32, i32
  }
  func.func @transform_3(%arg0: i32) -> (i32, i32) {
    %c0_i32 = arith.constant 0 : i32
    %c0_i32_0 = arith.constant 0 : i32
    %c0_i32_1 = arith.constant 0 : i32
    return %c0_i32, %c0_i32_0 : i32, i32
  }
  func.func @transform_4(%arg0: i32) -> (i32, i32) {
    %c0_i32 = arith.constant 0 : i32
    %c0_i32_0 = arith.constant 0 : i32
    %c0_i32_1 = arith.constant 0 : i32
    return %c0_i32, %c0_i32_0 : i32, i32
  }
  func.func @transform_5(%arg0: i32) -> (i32, i32) {
    %c0_i32 = arith.constant 0 : i32
    %c0_i32_0 = arith.constant 0 : i32
    %c0_i32_1 = arith.constant 0 : i32
    return %c0_i32, %c0_i32_0 : i32, i32
  }
  func.func @transform_6(%arg0: i32) -> (i32, i32) {
    %c0_i32 = arith.constant 0 : i32
    %c0_i32_0 = arith.constant 0 : i32
    %c0_i32_1 = arith.constant 0 : i32
    return %c0_i32, %c0_i32_0 : i32, i32
  }
  func.func @transform_7(%arg0: i32) -> (i32, i32) {
    %c0_i32 = arith.constant 0 : i32
    %c0_i32_0 = arith.constant 0 : i32
    return %arg0, %c0_i32 : i32, i32
  }
}

module attributes {stable_mosaic.version = 11 : i64} {
  func.func @discriminator_kernel(%arg0: i32, %arg1: memref<8x256xbf16, #tpu.memory_space<vmem>>, %arg2: memref<256x128xbf16, #tpu.memory_space<vmem>>, %arg3: memref<1x128xf32, #tpu.memory_space<vmem>>, %arg4: memref<128x128xbf16, #tpu.memory_space<vmem>>, %arg5: memref<1x128xf32, #tpu.memory_space<vmem>>, %arg6: memref<128x128xbf16, #tpu.memory_space<vmem>>, %arg7: memref<1x1xf32, #tpu.memory_space<smem>>, %arg8: memref<8x128xf32, #tpu.memory_space<vmem>>) attributes {dimension_semantics = [#tpu.dimension_semantics<parallel>], iteration_bounds = array<i64: 1>, scalar_prefetch = 0 : i64, scratch_operands = 0 : i64, tpu.core_type = #tpu.core_type<tc>, window_params = [{transform_indices = @transform_0, window_bounds = array<i64: 8, 256>}, {pipeline_mode = #tpu.pipeline_mode<synchronous>, transform_indices = @transform_1, window_bounds = array<i64: 256, 128>}, {pipeline_mode = #tpu.pipeline_mode<synchronous>, transform_indices = @transform_2, window_bounds = array<i64: 1, 128>}, {pipeline_mode = #tpu.pipeline_mode<synchronous>, transform_indices = @transform_3, window_bounds = array<i64: 128, 128>}, {pipeline_mode = #tpu.pipeline_mode<synchronous>, transform_indices = @transform_4, window_bounds = array<i64: 1, 128>}, {pipeline_mode = #tpu.pipeline_mode<synchronous>, transform_indices = @transform_5, window_bounds = array<i64: 128, 128>}, {transform_indices = @transform_6, window_bounds = array<i64: 1, 1>}, {transform_indices = @transform_7, window_bounds = array<i64: 8, 128>}]} {
    %c0 = arith.constant 0 : index
    %c0_0 = arith.constant 0 : index
    %0 = vector.load %arg1[%c0, %c0_0] : memref<8x256xbf16, #tpu.memory_space<vmem>>, vector<8x256xbf16>
    %c0_1 = arith.constant 0 : index
    %c0_2 = arith.constant 0 : index
    %1 = vector.load %arg2[%c0_1, %c0_2] : memref<256x128xbf16, #tpu.memory_space<vmem>>, vector<256x128xbf16>
    %cst = arith.constant dense<0.000000e+00> : vector<8x128xf32>
    %2 = tpu.matmul %0, %1, %cst {dimension_numbers = #tpu.dot_dimension_numbers<[1], [0], [0], [1], [0, 0, 1, 1], [], []>} : vector<8x256xbf16>, vector<256x128xbf16>, vector<8x128xf32> -> vector<8x128xf32>
    %c0_3 = arith.constant 0 : index
    %c0_4 = arith.constant 0 : index
    %3 = vector.load %arg3[%c0_3, %c0_4] : memref<1x128xf32, #tpu.memory_space<vmem>>, vector<1x128xf32>
    %4 = vector.broadcast %3 : vector<1x128xf32> to vector<8x128xf32>
    %5 = arith.addf %2, %4 : vector<8x128xf32>
    %cst_5 = arith.constant 0.000000e+00 : f32
    %6 = vector.broadcast %cst_5 : f32 to vector<8x128xf32>
    %7 = arith.cmpf ogt, %5, %6 : vector<8x128xf32>
    %cst_6 = arith.constant 2.000000e-01 : f32
    %8 = vector.broadcast %cst_6 : f32 to vector<8x128xf32>
    %9 = arith.mulf %8, %5 : vector<8x128xf32>
    %10 = arith.select %7, %5, %9 : vector<8x128xi1>, vector<8x128xf32>
    %11 = arith.truncf %10 : vector<8x128xf32> to vector<8x128xbf16>
    %c0_7 = arith.constant 0 : index
    %c0_8 = arith.constant 0 : index
    %12 = vector.load %arg4[%c0_7, %c0_8] : memref<128x128xbf16, #tpu.memory_space<vmem>>, vector<128x128xbf16>
    %cst_9 = arith.constant dense<0.000000e+00> : vector<8x128xf32>
    %13 = tpu.matmul %11, %12, %cst_9 {dimension_numbers = #tpu.dot_dimension_numbers<[1], [0], [0], [1], [0, 0, 1, 1], [], []>} : vector<8x128xbf16>, vector<128x128xbf16>, vector<8x128xf32> -> vector<8x128xf32>
    %c0_10 = arith.constant 0 : index
    %c0_11 = arith.constant 0 : index
    %14 = vector.load %arg5[%c0_10, %c0_11] : memref<1x128xf32, #tpu.memory_space<vmem>>, vector<1x128xf32>
    %15 = vector.broadcast %14 : vector<1x128xf32> to vector<8x128xf32>
    %16 = arith.addf %13, %15 : vector<8x128xf32>
    %cst_12 = arith.constant 0.000000e+00 : f32
    %17 = vector.broadcast %cst_12 : f32 to vector<8x128xf32>
    %18 = arith.cmpf ogt, %16, %17 : vector<8x128xf32>
    %cst_13 = arith.constant 2.000000e-01 : f32
    %19 = vector.broadcast %cst_13 : f32 to vector<8x128xf32>
    %20 = arith.mulf %19, %16 : vector<8x128xf32>
    %21 = arith.select %18, %16, %20 : vector<8x128xi1>, vector<8x128xf32>
    %22 = arith.truncf %21 : vector<8x128xf32> to vector<8x128xbf16>
    %c0_14 = arith.constant 0 : index
    %c0_15 = arith.constant 0 : index
    %23 = vector.load %arg6[%c0_14, %c0_15] : memref<128x128xbf16, #tpu.memory_space<vmem>>, vector<128x128xbf16>
    %cst_16 = arith.constant dense<0.000000e+00> : vector<8x128xf32>
    %24 = tpu.matmul %22, %23, %cst_16 {dimension_numbers = #tpu.dot_dimension_numbers<[1], [0], [0], [1], [0, 0, 1, 1], [], []>} : vector<8x128xbf16>, vector<128x128xbf16>, vector<8x128xf32> -> vector<8x128xf32>
    %c0_17 = arith.constant 0 : index
    %c0_18 = arith.constant 0 : index
    %25 = memref.load %arg7[%c0_17, %c0_18] : memref<1x1xf32, #tpu.memory_space<smem>>
    %26 = vector.broadcast %25 : f32 to vector<8x128xf32>
    %27 = arith.addf %24, %26 : vector<8x128xf32>
    %c0_19 = arith.constant 0 : index
    %c0_20 = arith.constant 0 : index
    %28 = vector.load %arg8[%c0_19, %c0_20] : memref<8x128xf32, #tpu.memory_space<vmem>>, vector<8x128xf32>
    tpu.vector_store %arg8[%c0_19, %c0_20], %27 {strides = array<i32>} : memref<8x128xf32, #tpu.memory_space<vmem>>, vector<8x128xf32>,
    return
  }
  func.func @transform_0(%arg0: i32) -> (i32, i32) {
    %c0_i32 = arith.constant 0 : i32
    %c0_i32_0 = arith.constant 0 : i32
    return %arg0, %c0_i32 : i32, i32
  }
  func.func @transform_1(%arg0: i32) -> (i32, i32) {
    %c0_i32 = arith.constant 0 : i32
    %c0_i32_0 = arith.constant 0 : i32
    %c0_i32_1 = arith.constant 0 : i32
    return %c0_i32, %c0_i32_0 : i32, i32
  }
  func.func @transform_2(%arg0: i32) -> (i32, i32) {
    %c0_i32 = arith.constant 0 : i32
    %c0_i32_0 = arith.constant 0 : i32
    %c0_i32_1 = arith.constant 0 : i32
    return %c0_i32, %c0_i32_0 : i32, i32
  }
  func.func @transform_3(%arg0: i32) -> (i32, i32) {
    %c0_i32 = arith.constant 0 : i32
    %c0_i32_0 = arith.constant 0 : i32
    %c0_i32_1 = arith.constant 0 : i32
    return %c0_i32, %c0_i32_0 : i32, i32
  }
  func.func @transform_4(%arg0: i32) -> (i32, i32) {
    %c0_i32 = arith.constant 0 : i32
    %c0_i32_0 = arith.constant 0 : i32
    %c0_i32_1 = arith.constant 0 : i32
    return %c0_i32, %c0_i32_0 : i32, i32
  }
  func.func @transform_5(%arg0: i32) -> (i32, i32) {
    %c0_i32 = arith.constant 0 : i32
    %c0_i32_0 = arith.constant 0 : i32
    %c0_i32_1 = arith.constant 0 : i32
    return %c0_i32, %c0_i32_0 : i32, i32
  }
  func.func @transform_6(%arg0: i32) -> (i32, i32) {
    %c0_i32 = arith.constant 0 : i32
    %c0_i32_0 = arith.constant 0 : i32
    %c0_i32_1 = arith.constant 0 : i32
    return %c0_i32, %c0_i32_0 : i32, i32
  }
  func.func @transform_7(%arg0: i32) -> (i32, i32) {
    %c0_i32 = arith.constant 0 : i32
    %c0_i32_0 = arith.constant 0 : i32
    return %arg0, %c0_i32 : i32, i32
  }
}

</mosaic_0001>

<llo_original>
// kernel: tpu_custom_call.1
$region0: #{tpu_custom_call.1}
  #allocation0 [shape = 'u32[]', space=smem, size = 0x4, offset = 0x4, fixed_abs, tag = 'smem constant byte address 0x4 - core index']
  #allocation1 [shape = 'u32[144,128]{1,0:T(1,128)}', space=vmem, size = 0x12000, scoped, tag = 'internal scratch']
  #allocation2 [shape = 'f32[1,1]{1,0:T(1,128)S(6)}', space=smem, size = 0x200, scoped, tag = 'scoped memory for tpu_custom_call.1']
  %s0 = inlined_call_operand.hbm [shape: bf16[8,256], index: 0, kind: input, shape index: {}]
  %s1 = inlined_call_operand.hbm [shape: bf16[256,128], index: 1, kind: input, shape index: {}]
  %s2 = inlined_call_operand.vmem [shape: f32[1,128], index: 2, kind: input, shape index: {}]
  %s3 = inlined_call_operand.hbm [shape: bf16[128,128], index: 3, kind: input, shape index: {}]
  %s4 = inlined_call_operand.vmem [shape: f32[1,128], index: 4, kind: input, shape index: {}]
  %s5 = inlined_call_operand.hbm [shape: bf16[128,128], index: 5, kind: input, shape index: {}]
  %s6 = inlined_call_operand.<no memory space> [shape: f32[1,1], index: 6, kind: input, shape index: {}]
  %s7 = inlined_call_operand.hbm [shape: f32[8,128], index: 7, kind: output, shape index: {}]
  %s8 = sld [smem:[#allocation0]]
  $region54: #{tpu_custom_call.1} parent=0
    _
  %s10 = ssub.s32 1, %s8
  %s11 = scalar_select 0, %s10, %s8
  %12 = sst [smem:[#allocation2]] %s6
  $region1: #{tpu_custom_call.1} parent=0
    #allocation3 [shape = 'u8[4096]{0}', space=vmem, size = 0x1000, scoped, tag = 'input window, operand 0, single buffered']
    #allocation4 [shape = 's32[1]{0}', space=sflag, size = 0x4, scoped, tag = 'scoped memory for tpu_custom_call.1']
    #allocation5 [shape = 's32[1]{0}', space=sflag, size = 0x4, scoped, tag = 'scoped memory for tpu_custom_call.1']
    #allocation6 [shape = 'u8[65536]{0}', space=vmem, size = 0x10000, scoped, tag = 'input window, operand 1, single buffered']
    #allocation7 [shape = 's32[1]{0}', space=sflag, size = 0x4, scoped, tag = 'scoped memory for tpu_custom_call.1']
    #allocation8 [shape = 'u8[32768]{0}', space=vmem, size = 0x8000, scoped, tag = 'input window, operand 3, single buffered']
    #allocation9 [shape = 'u8[32768]{0}', space=vmem, size = 0x8000, scoped, tag = 'input window, operand 5, single buffered']
    #allocation10 [shape = 's32[1]{0}', space=sflag, size = 0x4, scoped, tag = 'scoped memory for tpu_custom_call.1']
    #allocation11 [shape = 'u8[4096]{0}', space=vmem, size = 0x1000, scoped, tag = 'output window, operand 0, single buffered']
    %13 = vsyncpa [#allocation4], 0
    %14 = vsyncpa [#allocation7], 0
    %15 = vsyncpa [#allocation10], 0
    %16 = vsyncpa [#allocation5], 0
    // Predicated region
    $region2: #{tpu_custom_call.1} parent=1 // pred_check
      _
    $region3: #{tpu_custom_call.1} parent=1 // pred_check_branch
      %18 = sbr.rel (0) target = $region5
    $region4: #{tpu_custom_call.1} parent=1 // pred_region
      %s20 = ssub.s32 128, 128
      %21 = vsyncadd [#allocation4], %s20
      %s23 = sshll.u32 [#allocation3], 4
      %s24 = int_to_ptr.vmem [resolvable:$true] %s23
      %26 = dma.hbm_to_vmem [thread:$0]  %s0, 128, %s24, [#allocation4]
    $region5: #{tpu_custom_call.1} parent=1 // pred_fallthru
      _
    // Predicated region
    $region6: #{tpu_custom_call.1} parent=1 // pred_check
      _
    $region7: #{tpu_custom_call.1} parent=1 // pred_check_branch
      %28 = sbr.rel (0) target = $region9
    $region8: #{tpu_custom_call.1} parent=1 // pred_region
      %s30 = ssub.s32 2048, 2048
      %31 = vsyncadd [#allocation7], %s30
      %s32 = sshll.u32 [#allocation6], 4
      %s33 = int_to_ptr.vmem [resolvable:$true] %s32
      %38 = dma.hbm_to_vmem [thread:$0]  %s1, 2048, %s33, [#allocation7], 64, 64, 4
    $region9: #{tpu_custom_call.1} parent=1 // pred_fallthru
      _
    // Predicated region
    $region10: #{tpu_custom_call.1} parent=1 // pred_check
      _
    $region11: #{tpu_custom_call.1} parent=1 // pred_check_branch
      %40 = sbr.rel (0) target = $region13
    $region12: #{tpu_custom_call.1} parent=1 // pred_region
      _
    $region13: #{tpu_custom_call.1} parent=1 // pred_fallthru
      _
    // Predicated region
    $region14: #{tpu_custom_call.1} parent=1 // pred_check
      _
    $region15: #{tpu_custom_call.1} parent=1 // pred_check_branch
      %42 = sbr.rel (0) target = $region17
    $region16: #{tpu_custom_call.1} parent=1 // pred_region
      %s44 = ssub.s32 1024, 1024
      %45 = vsyncadd [#allocation7], %s44
      %s46 = sshll.u32 [#allocation8], 4
      %s47 = int_to_ptr.vmem [resolvable:$true] %s46
      %52 = dma.hbm_to_vmem [thread:$0]  %s3, 1024, %s47, [#allocation7], 64, 64, 4
    $region17: #{tpu_custom_call.1} parent=1 // pred_fallthru
      _
    // Predicated region
    $region18: #{tpu_custom_call.1} parent=1 // pred_check
      _
    $region19: #{tpu_custom_call.1} parent=1 // pred_check_branch
      %54 = sbr.rel (0) target = $region21
    $region20: #{tpu_custom_call.1} parent=1 // pred_region
      _
    $region21: #{tpu_custom_call.1} parent=1 // pred_fallthru
      _
    // Predicated region
    $region22: #{tpu_custom_call.1} parent=1 // pred_check
      _
    $region23: #{tpu_custom_call.1} parent=1 // pred_check_branch
      %56 = sbr.rel (0) target = $region25
    $region24: #{tpu_custom_call.1} parent=1 // pred_region
      %s58 = ssub.s32 1024, 1024
      %59 = vsyncadd [#allocation10], %s58
      %s60 = sshll.u32 [#allocation9], 4
      %s61 = int_to_ptr.vmem [resolvable:$true] %s60
      %66 = dma.hbm_to_vmem [thread:$0]  %s5, 1024, %s61, [#allocation10], 64, 64, 4
    $region25: #{tpu_custom_call.1} parent=1 // pred_fallthru
      _
    // Predicated region
    $region26: #{tpu_custom_call.1} parent=1 // pred_check
      _
    $region27: #{tpu_custom_call.1} parent=1 // pred_check_branch
      %68 = sbr.rel (0) target = $region29
    $region28: #{tpu_custom_call.1} parent=1 // pred_region
      _
    $region29: #{tpu_custom_call.1} parent=1 // pred_fallthru
      _
    // Predicated region
    $region30: #{tpu_custom_call.1} parent=1 // pred_check
      _
    $region31: #{tpu_custom_call.1} parent=1 // pred_check_branch
      %70 = sbr.rel (0) target = $region33
    $region32: #{tpu_custom_call.1} parent=1 // pred_region
      %71 = dma.done [#allocation4], 128
    $region33: #{tpu_custom_call.1} parent=1 // pred_fallthru
      _
    // Predicated region
    $region34: #{tpu_custom_call.1} parent=1 // pred_check
      _
    $region35: #{tpu_custom_call.1} parent=1 // pred_check_branch
      %73 = sbr.rel (0) target = $region37
    $region36: #{tpu_custom_call.1} parent=1 // pred_region
      %74 = dma.done [#allocation7], 2048
    $region37: #{tpu_custom_call.1} parent=1 // pred_fallthru
      _
    // Predicated region
    $region38: #{tpu_custom_call.1} parent=1 // pred_check
      _
    $region39: #{tpu_custom_call.1} parent=1 // pred_check_branch
      %76 = sbr.rel (0) target = $region41
    $region40: #{tpu_custom_call.1} parent=1 // pred_region
      %77 = dma.done [#allocation7], 1024
    $region41: #{tpu_custom_call.1} parent=1 // pred_fallthru
      _
    // Predicated region
    $region42: #{tpu_custom_call.1} parent=1 // pred_check
      _
    $region43: #{tpu_custom_call.1} parent=1 // pred_check_branch
      %79 = sbr.rel (0) target = $region45
    $region44: #{tpu_custom_call.1} parent=1 // pred_region
      %80 = dma.done [#allocation10], 1024
    $region45: #{tpu_custom_call.1} parent=1 // pred_fallthru
      _
    %v82 = vld [vmem:[#allocation3] sm:$0xff]
    %v83 = vld [vmem:[#allocation6] sm:$0xf]
    %v84 = vld [vmem:[#allocation6 + $0x4] sm:$0xf]
    %v85 = vld [vmem:[#allocation6 + $0x8] sm:$0xf]
    %v86 = vld [vmem:[#allocation6 + $0xc] sm:$0xf]
    %v87 = vld [vmem:[#allocation6 + $0x10] sm:$0xf]
    %v88 = vld [vmem:[#allocation6 + $0x14] sm:$0xf]
    %v89 = vld [vmem:[#allocation6 + $0x18] sm:$0xf]
    %v90 = vld [vmem:[#allocation6 + $0x1c] sm:$0xf]
    %v91 = vld [vmem:[#allocation6 + $0x20] sm:$0xf]
    %v92 = vld [vmem:[#allocation6 + $0x24] sm:$0xf]
    %v93 = vld [vmem:[#allocation6 + $0x28] sm:$0xf]
    %v94 = vld [vmem:[#allocation6 + $0x2c] sm:$0xf]
    %v95 = vld [vmem:[#allocation6 + $0x30] sm:$0xf]
    %v96 = vld [vmem:[#allocation6 + $0x34] sm:$0xf]
    %v97 = vld [vmem:[#allocation6 + $0x38] sm:$0xf]
    %v98 = vld [vmem:[#allocation6 + $0x3c] sm:$0xf]
    %v99 = vld [vmem:[#allocation6 + $0x40] sm:$0xf]
    %v100 = vld [vmem:[#allocation6 + $0x44] sm:$0xf]
    %v101 = vld [vmem:[#allocation6 + $0x48] sm:$0xf]
    %v102 = vld [vmem:[#allocation6 + $0x4c] sm:$0xf]
    %v103 = vld [vmem:[#allocation6 + $0x50] sm:$0xf]
    %v104 = vld [vmem:[#allocation6 + $0x54] sm:$0xf]
    %v105 = vld [vmem:[#allocation6 + $0x58] sm:$0xf]
    %v106 = vld [vmem:[#allocation6 + $0x5c] sm:$0xf]
    %v107 = vld [vmem:[#allocation6 + $0x60] sm:$0xf]
    %v108 = vld [vmem:[#allocation6 + $0x64] sm:$0xf]
    %v109 = vld [vmem:[#allocation6 + $0x68] sm:$0xf]
    %v110 = vld [vmem:[#allocation6 + $0x6c] sm:$0xf]
    %v111 = vld [vmem:[#allocation6 + $0x70] sm:$0xf]
    %v112 = vld [vmem:[#allocation6 + $0x74] sm:$0xf]
    %v113 = vld [vmem:[#allocation6 + $0x78] sm:$0xf]
    %v114 = vld [vmem:[#allocation6 + $0x7c] sm:$0xf]
    %v115 = vld [vmem:[%s2] sm:$0x1]
    %v117 = vlaneseq
    %v118 = vshrl.u32 %v117, 7
    %v119 = vsub.s32 0, %v118
    %v120 = vrot.slane %v115, %v119
    %v123 = vunpack.c.l.b16 %v82
    %v124 = vunpack.c.h.b16 %v82
    %v125 = vpack.c.b16 %v123, %v123
    %v126 = vpack.c.b16 %v124, %v124
    %v161 = vunpack.c.l.b16 %v83
    %v162 = vunpack.c.l.b16 %v84
    %v163 = vunpack.c.l.b16 %v85
    %v164 = vunpack.c.l.b16 %v86
    %v165 = vunpack.c.l.b16 %v87
    %v166 = vunpack.c.l.b16 %v88
    %v167 = vunpack.c.l.b16 %v89
    %v168 = vunpack.c.l.b16 %v90
    %v169 = vunpack.c.l.b16 %v91
    %v170 = vunpack.c.l.b16 %v92
    %v171 = vunpack.c.l.b16 %v93
    %v172 = vunpack.c.l.b16 %v94
    %v173 = vunpack.c.l.b16 %v95
    %v174 = vunpack.c.l.b16 %v96
    %v175 = vunpack.c.l.b16 %v97
    %v176 = vunpack.c.l.b16 %v98
    %v177 = vunpack.c.l.b16 %v99
    %v178 = vunpack.c.l.b16 %v100
    %v179 = vunpack.c.l.b16 %v101
    %v180 = vunpack.c.l.b16 %v102
    %v181 = vunpack.c.l.b16 %v103
    %v182 = vunpack.c.l.b16 %v104
    %v183 = vunpack.c.l.b16 %v105
    %v184 = vunpack.c.l.b16 %v106
    %v185 = vunpack.c.l.b16 %v107
    %v186 = vunpack.c.l.b16 %v108
    %v187 = vunpack.c.l.b16 %v109
    %v188 = vunpack.c.l.b16 %v110
    %v189 = vunpack.c.l.b16 %v111
    %v190 = vunpack.c.l.b16 %v112
    %v191 = vunpack.c.l.b16 %v113
    %v192 = vunpack.c.l.b16 %v114
    %v193 = vpack.c.b16 %v162, %v161
    %v194 = vpack.c.b16 %v164, %v163
    %v195 = vpack.c.b16 %v166, %v165
    %v196 = vpack.c.b16 %v168, %v167
    %v197 = vpack.c.b16 %v170, %v169
    %v198 = vpack.c.b16 %v172, %v171
    %v199 = vpack.c.b16 %v174, %v173
    %v200 = vpack.c.b16 %v176, %v175
    %v201 = vpack.c.b16 %v178, %v177
    %v202 = vpack.c.b16 %v180, %v179
    %v203 = vpack.c.b16 %v182, %v181
    %v204 = vpack.c.b16 %v184, %v183
    %v205 = vpack.c.b16 %v186, %v185
    %v206 = vpack.c.b16 %v188, %v187
    %v207 = vpack.c.b16 %v190, %v189
    %v208 = vpack.c.b16 %v192, %v191
    %225 = vmatprep.subr.bf16.mxu0 0
    %226 = vmatpush1.bf16.msra.mxu0 %v193
    %227 = vmatprep.subr.bf16.mxu0 0
    %228 = vmatpush1.bf16.msra.mxu0 %v194
    %229 = vmatprep.subr.bf16.mxu0 0
    %230 = vmatpush1.bf16.msra.mxu0 %v195
    %231 = vmatprep.subr.bf16.mxu0 0
    %232 = vmatpush1.bf16.msra.mxu0 %v196
    %233 = vmatprep.subr.bf16.mxu0 0
    %234 = vmatpush1.bf16.msra.mxu0 %v197
    %235 = vmatprep.subr.bf16.mxu0 0
    %236 = vmatpush1.bf16.msra.mxu0 %v198
    %237 = vmatprep.subr.bf16.mxu0 0
    %238 = vmatpush1.bf16.msra.mxu0 %v199
    %239 = vmatprep.subr.bf16.mxu0 0
    %240 = vmatpush1.bf16.msra.mxu0 %v200
    %241 = vmatprep.subr.bf16.mxu0 0
    %242 = vmatpush1.bf16.msra.mxu0 %v201
    %243 = vmatprep.subr.bf16.mxu0 0
    %244 = vmatpush1.bf16.msra.mxu0 %v202
    %245 = vmatprep.subr.bf16.mxu0 0
    %246 = vmatpush1.bf16.msra.mxu0 %v203
    %247 = vmatprep.subr.bf16.mxu0 0
    %248 = vmatpush1.bf16.msra.mxu0 %v204
    %249 = vmatprep.subr.bf16.mxu0 0
    %250 = vmatpush1.bf16.msra.mxu0 %v205
    %251 = vmatprep.subr.bf16.mxu0 0
    %252 = vmatpush1.bf16.msra.mxu0 %v206
    %253 = vmatprep.subr.bf16.mxu0 0
    %254 = vmatpush1.bf16.msra.mxu0 %v207
    %255 = vmatprep.subr.bf16.mxu0 0
    %256 = vmatpush1.bf16.msra.mxu0 %v208
    %257 = vmatprep.mubr.bf16.mxu0 %v126
    %258 = vmatmul.mubr.bf16.gmra.mrb[0].mxu0 %v125
    %v259 = vpop.f32.mrb[0].mxu0
    %v260 = vadd.f32 %v120, %v259
    %v261 = vpop.f32.mrb[0].mxu0
    %v262 = vpop.f32.mrb[0].mxu0
    %v263 = vpop.f32.mrb[0].mxu0
    %264 = vdwg.mxu0
    %vm265 = vcmp.gt.f32.partialorder %v260, 0.0
    %v266 = vmul.f32 %v260, 0.2
    %v267 = vsel %vm265, %v260, %v266
    %v268 = vpack.c.bf16 %v267, %v267
    %v269 = vld [vmem:[#allocation8] sm:$0xf]
    %v270 = vld [vmem:[#allocation8 + $0x4] sm:$0xf]
    %v271 = vld [vmem:[#allocation8 + $0x8] sm:$0xf]
    %v272 = vld [vmem:[#allocation8 + $0xc] sm:$0xf]
    %v273 = vld [vmem:[#allocation8 + $0x10] sm:$0xf]
    %v274 = vld [vmem:[#allocation8 + $0x14] sm:$0xf]
    %v275 = vld [vmem:[#allocation8 + $0x18] sm:$0xf]
    %v276 = vld [vmem:[#allocation8 + $0x1c] sm:$0xf]
    %v277 = vld [vmem:[#allocation8 + $0x20] sm:$0xf]
    %v278 = vld [vmem:[#allocation8 + $0x24] sm:$0xf]
    %v279 = vld [vmem:[#allocation8 + $0x28] sm:$0xf]
    %v280 = vld [vmem:[#allocation8 + $0x2c] sm:$0xf]
    %v281 = vld [vmem:[#allocation8 + $0x30] sm:$0xf]
    %v282 = vld [vmem:[#allocation8 + $0x34] sm:$0xf]
    %v283 = vld [vmem:[#allocation8 + $0x38] sm:$0xf]
    %v284 = vld [vmem:[#allocation8 + $0x3c] sm:$0xf]
    %v285 = vld [vmem:[%s4] sm:$0x1]
    %v287 = vlaneseq
    %v288 = vshrl.u32 %v287, 7
    %v289 = vsub.s32 0, %v288
    %v290 = vrot.slane %v285, %v289
    %v308 = vunpack.c.l.b16 %v269
    %v309 = vunpack.c.l.b16 %v270
    %v310 = vunpack.c.l.b16 %v271
    %v311 = vunpack.c.l.b16 %v272
    %v312 = vunpack.c.l.b16 %v273
    %v313 = vunpack.c.l.b16 %v274
    %v314 = vunpack.c.l.b16 %v275
    %v315 = vunpack.c.l.b16 %v276
    %v316 = vunpack.c.l.b16 %v277
    %v317 = vunpack.c.l.b16 %v278
    %v318 = vunpack.c.l.b16 %v279
    %v319 = vunpack.c.l.b16 %v280
    %v320 = vunpack.c.l.b16 %v281
    %v321 = vunpack.c.l.b16 %v282
    %v322 = vunpack.c.l.b16 %v283
    %v323 = vunpack.c.l.b16 %v284
    %v324 = vpack.c.b16 %v309, %v308
    %v325 = vpack.c.b16 %v311, %v310
    %v326 = vpack.c.b16 %v313, %v312
    %v327 = vpack.c.b16 %v315, %v314
    %v328 = vpack.c.b16 %v317, %v316
    %v329 = vpack.c.b16 %v319, %v318
    %v330 = vpack.c.b16 %v321, %v320
    %v331 = vpack.c.b16 %v323, %v322
    %340 = vmatprep.subr.bf16.mxu0 0
    %341 = vmatpush1.bf16.msra.mxu0 %v324
    %342 = vmatprep.subr.bf16.mxu0 0
    %343 = vmatpush1.bf16.msra.mxu0 %v325
    %344 = vmatprep.subr.bf16.mxu0 0
    %345 = vmatpush1.bf16.msra.mxu0 %v326
    %346 = vmatprep.subr.bf16.mxu0 0
    %347 = vmatpush1.bf16.msra.mxu0 %v327
    %348 = vmatprep.subr.bf16.mxu0 0
    %349 = vmatpush1.bf16.msra.mxu0 %v328
    %350 = vmatprep.subr.bf16.mxu0 0
    %351 = vmatpush1.bf16.msra.mxu0 %v329
    %352 = vmatprep.subr.bf16.mxu0 0
    %353 = vmatpush1.bf16.msra.mxu0 %v330
    %354 = vmatprep.subr.bf16.mxu0 0
    %355 = vmatpush1.bf16.msra.mxu0 %v331
    %356 = vmatprep.subr.bf16.mxu0 0
    %357 = vmatpush1.bf16.msra.mxu0 0
    %358 = vmatprep.subr.bf16.mxu0 0
    %359 = vmatpush1.bf16.msra.mxu0 0
    %360 = vmatprep.subr.bf16.mxu0 0
    %361 = vmatpush1.bf16.msra.mxu0 0
    %362 = vmatprep.subr.bf16.mxu0 0
    %363 = vmatpush1.bf16.msra.mxu0 0
    %364 = vmatprep.subr.bf16.mxu0 0
    %365 = vmatpush1.bf16.msra.mxu0 0
    %366 = vmatprep.subr.bf16.mxu0 0
    %367 = vmatpush1.bf16.msra.mxu0 0
    %368 = vmatprep.subr.bf16.mxu0 0
    %369 = vmatpush1.bf16.msra.mxu0 0
    %370 = vmatprep.subr.bf16.mxu0 0
    %371 = vmatpush1.bf16.msra.mxu0 0
    %372 = vmatprep.mubr.bf16.mxu0 0
    %373 = vmatmul.mubr.bf16.gmra.mrb[0].mxu0 %v268
    %v374 = vpop.f32.mrb[0].mxu0
    %v375 = vadd.f32 %v290, %v374
    %v376 = vpop.f32.mrb[0].mxu0
    %v377 = vpop.f32.mrb[0].mxu0
    %v378 = vpop.f32.mrb[0].mxu0
    %379 = vdwg.mxu0
    %vm380 = vcmp.gt.f32.partialorder %v375, 0.0
    %v381 = vmul.f32 %v375, 0.2
    %v382 = vsel %vm380, %v375, %v381
    %v383 = vpack.c.bf16 %v382, %v382
    %v384 = vld [vmem:[#allocation9] sm:$0xf]
    %v385 = vld [vmem:[#allocation9 + $0x4] sm:$0xf]
    %v386 = vld [vmem:[#allocation9 + $0x8] sm:$0xf]
    %v387 = vld [vmem:[#allocation9 + $0xc] sm:$0xf]
    %v388 = vld [vmem:[#allocation9 + $0x10] sm:$0xf]
    %v389 = vld [vmem:[#allocation9 + $0x14] sm:$0xf]
    %v390 = vld [vmem:[#allocation9 + $0x18] sm:$0xf]
    %v391 = vld [vmem:[#allocation9 + $0x1c] sm:$0xf]
    %v392 = vld [vmem:[#allocation9 + $0x20] sm:$0xf]
    %v393 = vld [vmem:[#allocation9 + $0x24] sm:$0xf]
    %v394 = vld [vmem:[#allocation9 + $0x28] sm:$0xf]
    %v395 = vld [vmem:[#allocation9 + $0x2c] sm:$0xf]
    %v396 = vld [vmem:[#allocation9 + $0x30] sm:$0xf]
    %v397 = vld [vmem:[#allocation9 + $0x34] sm:$0xf]
    %v398 = vld [vmem:[#allocation9 + $0x38] sm:$0xf]
    %v399 = vld [vmem:[#allocation9 + $0x3c] sm:$0xf]
    %s400 = sld [smem:[#allocation2]]
    %v401 = vstv %s400
    %v418 = vunpack.c.l.b16 %v384
    %v419 = vunpack.c.l.b16 %v385
    %v420 = vunpack.c.l.b16 %v386
    %v421 = vunpack.c.l.b16 %v387
    %v422 = vunpack.c.l.b16 %v388
    %v423 = vunpack.c.l.b16 %v389
    %v424 = vunpack.c.l.b16 %v390
    %v425 = vunpack.c.l.b16 %v391
    %v426 = vunpack.c.l.b16 %v392
    %v427 = vunpack.c.l.b16 %v393
    %v428 = vunpack.c.l.b16 %v394
    %v429 = vunpack.c.l.b16 %v395
    %v430 = vunpack.c.l.b16 %v396
    %v431 = vunpack.c.l.b16 %v397
    %v432 = vunpack.c.l.b16 %v398
    %v433 = vunpack.c.l.b16 %v399
    %v434 = vpack.c.b16 %v419, %v418
    %v435 = vpack.c.b16 %v421, %v420
    %v436 = vpack.c.b16 %v423, %v422
    %v437 = vpack.c.b16 %v425, %v424
    %v438 = vpack.c.b16 %v427, %v426
    %v439 = vpack.c.b16 %v429, %v428
    %v440 = vpack.c.b16 %v431, %v430
    %v441 = vpack.c.b16 %v433, %v432
    %450 = vmatprep.subr.bf16.mxu0 0
    %451 = vmatpush1.bf16.msra.mxu0 %v434
    %452 = vmatprep.subr.bf16.mxu0 0
    %453 = vmatpush1.bf16.msra.mxu0 %v435
    %454 = vmatprep.subr.bf16.mxu0 0
    %455 = vmatpush1.bf16.msra.mxu0 %v436
    %456 = vmatprep.subr.bf16.mxu0 0
    %457 = vmatpush1.bf16.msra.mxu0 %v437
    %458 = vmatprep.subr.bf16.mxu0 0
    %459 = vmatpush1.bf16.msra.mxu0 %v438
    %460 = vmatprep.subr.bf16.mxu0 0
    %461 = vmatpush1.bf16.msra.mxu0 %v439
    %462 = vmatprep.subr.bf16.mxu0 0
    %463 = vmatpush1.bf16.msra.mxu0 %v440
    %464 = vmatprep.subr.bf16.mxu0 0
    %465 = vmatpush1.bf16.msra.mxu0 %v441
    %466 = vmatprep.subr.bf16.mxu0 0
    %467 = vmatpush1.bf16.msra.mxu0 0
    %468 = vmatprep.subr.bf16.mxu0 0
    %469 = vmatpush1.bf16.msra.mxu0 0
    %470 = vmatprep.subr.bf16.mxu0 0
    %471 = vmatpush1.bf16.msra.mxu0 0
    %472 = vmatprep.subr.bf16.mxu0 0
    %473 = vmatpush1.bf16.msra.mxu0 0
    %474 = vmatprep.subr.bf16.mxu0 0
    %475 = vmatpush1.bf16.msra.mxu0 0
    %476 = vmatprep.subr.bf16.mxu0 0
    %477 = vmatpush1.bf16.msra.mxu0 0
    %478 = vmatprep.subr.bf16.mxu0 0
    %479 = vmatpush1.bf16.msra.mxu0 0
    %480 = vmatprep.subr.bf16.mxu0 0
    %481 = vmatpush1.bf16.msra.mxu0 0
    %482 = vmatprep.mubr.bf16.mxu0 0
    %483 = vmatmul.mubr.bf16.gmra.mrb[0].mxu0 %v383
    %v484 = vpop.f32.mrb[0].mxu0
    %v485 = vadd.f32 %v401, %v484
    %v486 = vpop.f32.mrb[0].mxu0
    %v487 = vpop.f32.mrb[0].mxu0
    %v488 = vpop.f32.mrb[0].mxu0
    %489 = vdwg.mxu0
    %490 = vst [vmem:[#allocation11] sm:$0xff] %v485
    // Predicated region
    $region46: #{tpu_custom_call.1} parent=1 // pred_check
      _
    $region47: #{tpu_custom_call.1} parent=1 // pred_check_branch
      %492 = sbr.rel (0) target = $region49
    $region48: #{tpu_custom_call.1} parent=1 // pred_region
      %s494 = ssub.s32 128, 128
      %495 = vsyncadd [#allocation5], %s494
      %s497 = sshll.u32 [#allocation11], 4
      %s498 = int_to_ptr.vmem [resolvable:$true] %s497
      %500 = dma.vmem_to_hbm [thread:$0]  %s498, 128, %s7, [#allocation5]
    $region49: #{tpu_custom_call.1} parent=1 // pred_fallthru
      _
    // Predicated region
    $region50: #{tpu_custom_call.1} parent=1 // pred_check
      _
    $region51: #{tpu_custom_call.1} parent=1 // pred_check_branch
      %502 = sbr.rel (0) target = $region53
    $region52: #{tpu_custom_call.1} parent=1 // pred_region
      %503 = dma.done [#allocation5], 128
    $region53: #{tpu_custom_call.1} parent=1 // pred_fallthru
      _
    %504 = vsyncpa [#allocation4], 1
    %505 = vsyncpa [#allocation7], 1
    %506 = vsyncpa [#allocation10], 1
    %507 = vsyncpa [#allocation5], 1

// kernel: tpu_custom_call.1
$region0: #{tpu_custom_call.1}
  #allocation0 [shape = 'u32[]', space=smem, size = 0x4, offset = 0x4, fixed_abs, tag = 'smem constant byte address 0x4 - core index']
  #allocation1 [shape = 'u32[144,128]{1,0:T(1,128)}', space=vmem, size = 0x12000, scoped, tag = 'internal scratch']
  #allocation2 [shape = 'f32[1,1]{1,0:T(1,128)S(6)}', space=smem, size = 0x200, scoped, tag = 'scoped memory for tpu_custom_call.1']
  %s0 = inlined_call_operand.hbm [shape: bf16[8,256], index: 0, kind: input, shape index: {}]
  %s1 = inlined_call_operand.hbm [shape: bf16[256,128], index: 1, kind: input, shape index: {}]
  %s2 = inlined_call_operand.vmem [shape: f32[1,128], index: 2, kind: input, shape index: {}]
  %s3 = inlined_call_operand.hbm [shape: bf16[128,128], index: 3, kind: input, shape index: {}]
  %s4 = inlined_call_operand.vmem [shape: f32[1,128], index: 4, kind: input, shape index: {}]
  %s5 = inlined_call_operand.hbm [shape: bf16[128,128], index: 5, kind: input, shape index: {}]
  %s6 = inlined_call_operand.<no memory space> [shape: f32[1,1], index: 6, kind: input, shape index: {}]
  %s7 = inlined_call_operand.hbm [shape: f32[8,128], index: 7, kind: output, shape index: {}]
  %s8 = sld [smem:[#allocation0]]
  $region54: #{tpu_custom_call.1} parent=0
    _
  %s10 = ssub.s32 1, %s8
  %s11 = scalar_select 0, %s10, %s8
  %12 = sst [smem:[#allocation2]] %s6
  $region1: #{tpu_custom_call.1} parent=0
    #allocation3 [shape = 'u8[4096]{0}', space=vmem, size = 0x1000, scoped, tag = 'input window, operand 0, single buffered']
    #allocation4 [shape = 's32[1]{0}', space=sflag, size = 0x4, scoped, tag = 'scoped memory for tpu_custom_call.1']
    #allocation5 [shape = 's32[1]{0}', space=sflag, size = 0x4, scoped, tag = 'scoped memory for tpu_custom_call.1']
    #allocation6 [shape = 'u8[65536]{0}', space=vmem, size = 0x10000, scoped, tag = 'input window, operand 1, single buffered']
    #allocation7 [shape = 's32[1]{0}', space=sflag, size = 0x4, scoped, tag = 'scoped memory for tpu_custom_call.1']
    #allocation8 [shape = 'u8[32768]{0}', space=vmem, size = 0x8000, scoped, tag = 'input window, operand 3, single buffered']
    #allocation9 [shape = 'u8[32768]{0}', space=vmem, size = 0x8000, scoped, tag = 'input window, operand 5, single buffered']
    #allocation10 [shape = 's32[1]{0}', space=sflag, size = 0x4, scoped, tag = 'scoped memory for tpu_custom_call.1']
    #allocation11 [shape = 'u8[4096]{0}', space=vmem, size = 0x1000, scoped, tag = 'output window, operand 0, single buffered']
    %13 = vsyncpa [#allocation4], 0
    %14 = vsyncpa [#allocation7], 0
    %15 = vsyncpa [#allocation10], 0
    %16 = vsyncpa [#allocation5], 0
    // Predicated region
    $region2: #{tpu_custom_call.1} parent=1 // pred_check
      _
    $region3: #{tpu_custom_call.1} parent=1 // pred_check_branch
      %18 = sbr.rel (0) target = $region5
    $region4: #{tpu_custom_call.1} parent=1 // pred_region
      %s20 = ssub.s32 128, 128
      %21 = vsyncadd [#allocation4], %s20
      %s23 = sshll.u32 [#allocation3], 4
      %s24 = int_to_ptr.vmem [resolvable:$true] %s23
      %26 = dma.hbm_to_vmem [thread:$0]  %s0, 128, %s24, [#allocation4]
    $region5: #{tpu_custom_call.1} parent=1 // pred_fallthru
      _
    // Predicated region
    $region6: #{tpu_custom_call.1} parent=1 // pred_check
      _
    $region7: #{tpu_custom_call.1} parent=1 // pred_check_branch
      %28 = sbr.rel (0) target = $region9
    $region8: #{tpu_custom_call.1} parent=1 // pred_region
      %s30 = ssub.s32 2048, 2048
      %31 = vsyncadd [#allocation7], %s30
      %s32 = sshll.u32 [#allocation6], 4
      %s33 = int_to_ptr.vmem [resolvable:$true] %s32
      %38 = dma.hbm_to_vmem [thread:$0]  %s1, 2048, %s33, [#allocation7], 64, 64, 4
    $region9: #{tpu_custom_call.1} parent=1 // pred_fallthru
      _
    // Predicated region
    $region10: #{tpu_custom_call.1} parent=1 // pred_check
      _
    $region11: #{tpu_custom_call.1} parent=1 // pred_check_branch
      %40 = sbr.rel (0) target = $region13
    $region12: #{tpu_custom_call.1} parent=1 // pred_region
      _
    $region13: #{tpu_custom_call.1} parent=1 // pred_fallthru
      _
    // Predicated region
    $region14: #{tpu_custom_call.1} parent=1 // pred_check
      _
    $region15: #{tpu_custom_call.1} parent=1 // pred_check_branch
      %42 = sbr.rel (0) target = $region17
    $region16: #{tpu_custom_call.1} parent=1 // pred_region
      %s44 = ssub.s32 1024, 1024
      %45 = vsyncadd [#allocation7], %s44
      %s46 = sshll.u32 [#allocation8], 4
      %s47 = int_to_ptr.vmem [resolvable:$true] %s46
      %52 = dma.hbm_to_vmem [thread:$0]  %s3, 1024, %s47, [#allocation7], 64, 64, 4
    $region17: #{tpu_custom_call.1} parent=1 // pred_fallthru
      _
    // Predicated region
    $region18: #{tpu_custom_call.1} parent=1 // pred_check
      _
    $region19: #{tpu_custom_call.1} parent=1 // pred_check_branch
      %54 = sbr.rel (0) target = $region21
    $region20: #{tpu_custom_call.1} parent=1 // pred_region
      _
    $region21: #{tpu_custom_call.1} parent=1 // pred_fallthru
      _
    // Predicated region
    $region22: #{tpu_custom_call.1} parent=1 // pred_check
      _
    $region23: #{tpu_custom_call.1} parent=1 // pred_check_branch
      %56 = sbr.rel (0) target = $region25
    $region24: #{tpu_custom_call.1} parent=1 // pred_region
      %s58 = ssub.s32 1024, 1024
      %59 = vsyncadd [#allocation10], %s58
      %s60 = sshll.u32 [#allocation9], 4
      %s61 = int_to_ptr.vmem [resolvable:$true] %s60
      %66 = dma.hbm_to_vmem [thread:$0]  %s5, 1024, %s61, [#allocation10], 64, 64, 4
    $region25: #{tpu_custom_call.1} parent=1 // pred_fallthru
      _
    // Predicated region
    $region26: #{tpu_custom_call.1} parent=1 // pred_check
      _
    $region27: #{tpu_custom_call.1} parent=1 // pred_check_branch
      %68 = sbr.rel (0) target = $region29
    $region28: #{tpu_custom_call.1} parent=1 // pred_region
      _
    $region29: #{tpu_custom_call.1} parent=1 // pred_fallthru
      _
    // Predicated region
    $region30: #{tpu_custom_call.1} parent=1 // pred_check
      _
    $region31: #{tpu_custom_call.1} parent=1 // pred_check_branch
      %70 = sbr.rel (0) target = $region33
    $region32: #{tpu_custom_call.1} parent=1 // pred_region
      %71 = dma.done [#allocation4], 128
    $region33: #{tpu_custom_call.1} parent=1 // pred_fallthru
      _
    // Predicated region
    $region34: #{tpu_custom_call.1} parent=1 // pred_check
      _
    $region35: #{tpu_custom_call.1} parent=1 // pred_check_branch
      %73 = sbr.rel (0) target = $region37
    $region36: #{tpu_custom_call.1} parent=1 // pred_region
      %74 = dma.done [#allocation7], 2048
    $region37: #{tpu_custom_call.1} parent=1 // pred_fallthru
      _
    // Predicated region
    $region38: #{tpu_custom_call.1} parent=1 // pred_check
      _
    $region39: #{tpu_custom_call.1} parent=1 // pred_check_branch
      %76 = sbr.rel (0) target = $region41
    $region40: #{tpu_custom_call.1} parent=1 // pred_region
      %77 = dma.done [#allocation7], 1024
    $region41: #{tpu_custom_call.1} parent=1 // pred_fallthru
      _
    // Predicated region
    $region42: #{tpu_custom_call.1} parent=1 // pred_check
      _
    $region43: #{tpu_custom_call.1} parent=1 // pred_check_branch
      %79 = sbr.rel (0) target = $region45
    $region44: #{tpu_custom_call.1} parent=1 // pred_region
      %80 = dma.done [#allocation10], 1024
    $region45: #{tpu_custom_call.1} parent=1 // pred_fallthru
      _
    %v82 = vld [vmem:[#allocation3] sm:$0xff]
    %v83 = vld [vmem:[#allocation6] sm:$0xf]
    %v84 = vld [vmem:[#allocation6 + $0x4] sm:$0xf]
    %v85 = vld [vmem:[#allocation6 + $0x8] sm:$0xf]
    %v86 = vld [vmem:[#allocation6 + $0xc] sm:$0xf]
    %v87 = vld [vmem:[#allocation6 + $0x10] sm:$0xf]
    %v88 = vld [vmem:[#allocation6 + $0x14] sm:$0xf]
    %v89 = vld [vmem:[#allocation6 + $0x18] sm:$0xf]
    %v90 = vld [vmem:[#allocation6 + $0x1c] sm:$0xf]
    %v91 = vld [vmem:[#allocation6 + $0x20] sm:$0xf]
    %v92 = vld [vmem:[#allocation6 + $0x24] sm:$0xf]
    %v93 = vld [vmem:[#allocation6 + $0x28] sm:$0xf]
    %v94 = vld [vmem:[#allocation6 + $0x2c] sm:$0xf]
    %v95 = vld [vmem:[#allocation6 + $0x30] sm:$0xf]
    %v96 = vld [vmem:[#allocation6 + $0x34] sm:$0xf]
    %v97 = vld [vmem:[#allocation6 + $0x38] sm:$0xf]
    %v98 = vld [vmem:[#allocation6 + $0x3c] sm:$0xf]
    %v99 = vld [vmem:[#allocation6 + $0x40] sm:$0xf]
    %v100 = vld [vmem:[#allocation6 + $0x44] sm:$0xf]
    %v101 = vld [vmem:[#allocation6 + $0x48] sm:$0xf]
    %v102 = vld [vmem:[#allocation6 + $0x4c] sm:$0xf]
    %v103 = vld [vmem:[#allocation6 + $0x50] sm:$0xf]
    %v104 = vld [vmem:[#allocation6 + $0x54] sm:$0xf]
    %v105 = vld [vmem:[#allocation6 + $0x58] sm:$0xf]
    %v106 = vld [vmem:[#allocation6 + $0x5c] sm:$0xf]
    %v107 = vld [vmem:[#allocation6 + $0x60] sm:$0xf]
    %v108 = vld [vmem:[#allocation6 + $0x64] sm:$0xf]
    %v109 = vld [vmem:[#allocation6 + $0x68] sm:$0xf]
    %v110 = vld [vmem:[#allocation6 + $0x6c] sm:$0xf]
    %v111 = vld [vmem:[#allocation6 + $0x70] sm:$0xf]
    %v112 = vld [vmem:[#allocation6 + $0x74] sm:$0xf]
    %v113 = vld [vmem:[#allocation6 + $0x78] sm:$0xf]
    %v114 = vld [vmem:[#allocation6 + $0x7c] sm:$0xf]
    %v115 = vld [vmem:[%s2] sm:$0x1]
    %v117 = vlaneseq
    %v118 = vshrl.u32 %v117, 7
    %v119 = vsub.s32 0, %v118
    %v120 = vrot.slane %v115, %v119
    %v123 = vunpack.c.l.b16 %v82
    %v124 = vunpack.c.h.b16 %v82
    %v125 = vpack.c.b16 %v123, %v123
    %v126 = vpack.c.b16 %v124, %v124
    %v161 = vunpack.c.l.b16 %v83
    %v162 = vunpack.c.l.b16 %v84
    %v163 = vunpack.c.l.b16 %v85
    %v164 = vunpack.c.l.b16 %v86
    %v165 = vunpack.c.l.b16 %v87
    %v166 = vunpack.c.l.b16 %v88
    %v167 = vunpack.c.l.b16 %v89
    %v168 = vunpack.c.l.b16 %v90
    %v169 = vunpack.c.l.b16 %v91
    %v170 = vunpack.c.l.b16 %v92
    %v171 = vunpack.c.l.b16 %v93
    %v172 = vunpack.c.l.b16 %v94
    %v173 = vunpack.c.l.b16 %v95
    %v174 = vunpack.c.l.b16 %v96
    %v175 = vunpack.c.l.b16 %v97
    %v176 = vunpack.c.l.b16 %v98
    %v177 = vunpack.c.l.b16 %v99
    %v178 = vunpack.c.l.b16 %v100
    %v179 = vunpack.c.l.b16 %v101
    %v180 = vunpack.c.l.b16 %v102
    %v181 = vunpack.c.l.b16 %v103
    %v182 = vunpack.c.l.b16 %v104
    %v183 = vunpack.c.l.b16 %v105
    %v184 = vunpack.c.l.b16 %v106
    %v185 = vunpack.c.l.b16 %v107
    %v186 = vunpack.c.l.b16 %v108
    %v187 = vunpack.c.l.b16 %v109
    %v188 = vunpack.c.l.b16 %v110
    %v189 = vunpack.c.l.b16 %v111
    %v190 = vunpack.c.l.b16 %v112
    %v191 = vunpack.c.l.b16 %v113
    %v192 = vunpack.c.l.b16 %v114
    %v193 = vpack.c.b16 %v162, %v161
    %v194 = vpack.c.b16 %v164, %v163
    %v195 = vpack.c.b16 %v166, %v165
    %v196 = vpack.c.b16 %v168, %v167
    %v197 = vpack.c.b16 %v170, %v169
    %v198 = vpack.c.b16 %v172, %v171
    %v199 = vpack.c.b16 %v174, %v173
    %v200 = vpack.c.b16 %v176, %v175
    %v201 = vpack.c.b16 %v178, %v177
    %v202 = vpack.c.b16 %v180, %v179
    %v203 = vpack.c.b16 %v182, %v181
    %v204 = vpack.c.b16 %v184, %v183
    %v205 = vpack.c.b16 %v186, %v185
    %v206 = vpack.c.b16 %v188, %v187
    %v207 = vpack.c.b16 %v190, %v189
    %v208 = vpack.c.b16 %v192, %v191
    %225 = vmatprep.subr.bf16.mxu0 0
    %226 = vmatpush1.bf16.msra.mxu0 %v193
    %227 = vmatprep.subr.bf16.mxu0 0
    %228 = vmatpush1.bf16.msra.mxu0 %v194
    %229 = vmatprep.subr.bf16.mxu0 0
    %230 = vmatpush1.bf16.msra.mxu0 %v195
    %231 = vmatprep.subr.bf16.mxu0 0
    %232 = vmatpush1.bf16.msra.mxu0 %v196
    %233 = vmatprep.subr.bf16.mxu0 0
    %234 = vmatpush1.bf16.msra.mxu0 %v197
    %235 = vmatprep.subr.bf16.mxu0 0
    %236 = vmatpush1.bf16.msra.mxu0 %v198
    %237 = vmatprep.subr.bf16.mxu0 0
    %238 = vmatpush1.bf16.msra.mxu0 %v199
    %239 = vmatprep.subr.bf16.mxu0 0
    %240 = vmatpush1.bf16.msra.mxu0 %v200
    %241 = vmatprep.subr.bf16.mxu0 0
    %242 = vmatpush1.bf16.msra.mxu0 %v201
    %243 = vmatprep.subr.bf16.mxu0 0
    %244 = vmatpush1.bf16.msra.mxu0 %v202
    %245 = vmatprep.subr.bf16.mxu0 0
    %246 = vmatpush1.bf16.msra.mxu0 %v203
    %247 = vmatprep.subr.bf16.mxu0 0
    %248 = vmatpush1.bf16.msra.mxu0 %v204
    %249 = vmatprep.subr.bf16.mxu0 0
    %250 = vmatpush1.bf16.msra.mxu0 %v205
    %251 = vmatprep.subr.bf16.mxu0 0
    %252 = vmatpush1.bf16.msra.mxu0 %v206
    %253 = vmatprep.subr.bf16.mxu0 0
    %254 = vmatpush1.bf16.msra.mxu0 %v207
    %255 = vmatprep.subr.bf16.mxu0 0
    %256 = vmatpush1.bf16.msra.mxu0 %v208
    %257 = vmatprep.mubr.bf16.mxu0 %v126
    %258 = vmatmul.mubr.bf16.gmra.mrb[0].mxu0 %v125
    %v259 = vpop.f32.mrb[0].mxu0
    %v260 = vadd.f32 %v120, %v259
    %v261 = vpop.f32.mrb[0].mxu0
    %v262 = vpop.f32.mrb[0].mxu0
    %v263 = vpop.f32.mrb[0].mxu0
    %264 = vdwg.mxu0
    %vm265 = vcmp.gt.f32.partialorder %v260, 0.0
    %v266 = vmul.f32 %v260, 0.2
    %v267 = vsel %vm265, %v260, %v266
    %v268 = vpack.c.bf16 %v267, %v267
    %v269 = vld [vmem:[#allocation8] sm:$0xf]
    %v270 = vld [vmem:[#allocation8 + $0x4] sm:$0xf]
    %v271 = vld [vmem:[#allocation8 + $0x8] sm:$0xf]
    %v272 = vld [vmem:[#allocation8 + $0xc] sm:$0xf]
    %v273 = vld [vmem:[#allocation8 + $0x10] sm:$0xf]
    %v274 = vld [vmem:[#allocation8 + $0x14] sm:$0xf]
    %v275 = vld [vmem:[#allocation8 + $0x18] sm:$0xf]
    %v276 = vld [vmem:[#allocation8 + $0x1c] sm:$0xf]
    %v277 = vld [vmem:[#allocation8 + $0x20] sm:$0xf]
    %v278 = vld [vmem:[#allocation8 + $0x24] sm:$0xf]
    %v279 = vld [vmem:[#allocation8 + $0x28] sm:$0xf]
    %v280 = vld [vmem:[#allocation8 + $0x2c] sm:$0xf]
    %v281 = vld [vmem:[#allocation8 + $0x30] sm:$0xf]
    %v282 = vld [vmem:[#allocation8 + $0x34] sm:$0xf]
    %v283 = vld [vmem:[#allocation8 + $0x38] sm:$0xf]
    %v284 = vld [vmem:[#allocation8 + $0x3c] sm:$0xf]
    %v285 = vld [vmem:[%s4] sm:$0x1]
    %v287 = vlaneseq
    %v288 = vshrl.u32 %v287, 7
    %v289 = vsub.s32 0, %v288
    %v290 = vrot.slane %v285, %v289
    %v308 = vunpack.c.l.b16 %v269
    %v309 = vunpack.c.l.b16 %v270
    %v310 = vunpack.c.l.b16 %v271
    %v311 = vunpack.c.l.b16 %v272
    %v312 = vunpack.c.l.b16 %v273
    %v313 = vunpack.c.l.b16 %v274
    %v314 = vunpack.c.l.b16 %v275
    %v315 = vunpack.c.l.b16 %v276
    %v316 = vunpack.c.l.b16 %v277
    %v317 = vunpack.c.l.b16 %v278
    %v318 = vunpack.c.l.b16 %v279
    %v319 = vunpack.c.l.b16 %v280
    %v320 = vunpack.c.l.b16 %v281
    %v321 = vunpack.c.l.b16 %v282
    %v322 = vunpack.c.l.b16 %v283
    %v323 = vunpack.c.l.b16 %v284
    %v324 = vpack.c.b16 %v309, %v308
    %v325 = vpack.c.b16 %v311, %v310
    %v326 = vpack.c.b16 %v313, %v312
    %v327 = vpack.c.b16 %v315, %v314
    %v328 = vpack.c.b16 %v317, %v316
    %v329 = vpack.c.b16 %v319, %v318
    %v330 = vpack.c.b16 %v321, %v320
    %v331 = vpack.c.b16 %v323, %v322
    %340 = vmatprep.subr.bf16.mxu0 0
    %341 = vmatpush1.bf16.msra.mxu0 %v324
    %342 = vmatprep.subr.bf16.mxu0 0
    %343 = vmatpush1.bf16.msra.mxu0 %v325
    %344 = vmatprep.subr.bf16.mxu0 0
    %345 = vmatpush1.bf16.msra.mxu0 %v326
    %346 = vmatprep.subr.bf16.mxu0 0
    %347 = vmatpush1.bf16.msra.mxu0 %v327
    %348 = vmatprep.subr.bf16.mxu0 0
    %349 = vmatpush1.bf16.msra.mxu0 %v328
    %350 = vmatprep.subr.bf16.mxu0 0
    %351 = vmatpush1.bf16.msra.mxu0 %v329
    %352 = vmatprep.subr.bf16.mxu0 0
    %353 = vmatpush1.bf16.msra.mxu0 %v330
    %354 = vmatprep.subr.bf16.mxu0 0
    %355 = vmatpush1.bf16.msra.mxu0 %v331
    %356 = vmatprep.subr.bf16.mxu0 0
    %357 = vmatpush1.bf16.msra.mxu0 0
    %358 = vmatprep.subr.bf16.mxu0 0
    %359 = vmatpush1.bf16.msra.mxu0 0
    %360 = vmatprep.subr.bf16.mxu0 0
    %361 = vmatpush1.bf16.msra.mxu0 0
    %362 = vmatprep.subr.bf16.mxu0 0
    %363 = vmatpush1.bf16.msra.mxu0 0
    %364 = vmatprep.subr.bf16.mxu0 0
    %365 = vmatpush1.bf16.msra.mxu0 0
    %366 = vmatprep.subr.bf16.mxu0 0
    %367 = vmatpush1.bf16.msra.mxu0 0
    %368 = vmatprep.subr.bf16.mxu0 0
    %369 = vmatpush1.bf16.msra.mxu0 0
    %370 = vmatprep.subr.bf16.mxu0 0
    %371 = vmatpush1.bf16.msra.mxu0 0
    %372 = vmatprep.mubr.bf16.mxu0 0
    %373 = vmatmul.mubr.bf16.gmra.mrb[0].mxu0 %v268
    %v374 = vpop.f32.mrb[0].mxu0
    %v375 = vadd.f32 %v290, %v374
    %v376 = vpop.f32.mrb[0].mxu0
    %v377 = vpop.f32.mrb[0].mxu0
    %v378 = vpop.f32.mrb[0].mxu0
    %379 = vdwg.mxu0
    %vm380 = vcmp.gt.f32.partialorder %v375, 0.0
    %v381 = vmul.f32 %v375, 0.2
    %v382 = vsel %vm380, %v375, %v381
    %v383 = vpack.c.bf16 %v382, %v382
    %v384 = vld [vmem:[#allocation9] sm:$0xf]
    %v385 = vld [vmem:[#allocation9 + $0x4] sm:$0xf]
    %v386 = vld [vmem:[#allocation9 + $0x8] sm:$0xf]
    %v387 = vld [vmem:[#allocation9 + $0xc] sm:$0xf]
    %v388 = vld [vmem:[#allocation9 + $0x10] sm:$0xf]
    %v389 = vld [vmem:[#allocation9 + $0x14] sm:$0xf]
    %v390 = vld [vmem:[#allocation9 + $0x18] sm:$0xf]
    %v391 = vld [vmem:[#allocation9 + $0x1c] sm:$0xf]
    %v392 = vld [vmem:[#allocation9 + $0x20] sm:$0xf]
    %v393 = vld [vmem:[#allocation9 + $0x24] sm:$0xf]
    %v394 = vld [vmem:[#allocation9 + $0x28] sm:$0xf]
    %v395 = vld [vmem:[#allocation9 + $0x2c] sm:$0xf]
    %v396 = vld [vmem:[#allocation9 + $0x30] sm:$0xf]
    %v397 = vld [vmem:[#allocation9 + $0x34] sm:$0xf]
    %v398 = vld [vmem:[#allocation9 + $0x38] sm:$0xf]
    %v399 = vld [vmem:[#allocation9 + $0x3c] sm:$0xf]
    %s400 = sld [smem:[#allocation2]]
    %v401 = vstv %s400
    %v418 = vunpack.c.l.b16 %v384
    %v419 = vunpack.c.l.b16 %v385
    %v420 = vunpack.c.l.b16 %v386
    %v421 = vunpack.c.l.b16 %v387
    %v422 = vunpack.c.l.b16 %v388
    %v423 = vunpack.c.l.b16 %v389
    %v424 = vunpack.c.l.b16 %v390
    %v425 = vunpack.c.l.b16 %v391
    %v426 = vunpack.c.l.b16 %v392
    %v427 = vunpack.c.l.b16 %v393
    %v428 = vunpack.c.l.b16 %v394
    %v429 = vunpack.c.l.b16 %v395
    %v430 = vunpack.c.l.b16 %v396
    %v431 = vunpack.c.l.b16 %v397
    %v432 = vunpack.c.l.b16 %v398
    %v433 = vunpack.c.l.b16 %v399
    %v434 = vpack.c.b16 %v419, %v418
    %v435 = vpack.c.b16 %v421, %v420
    %v436 = vpack.c.b16 %v423, %v422
    %v437 = vpack.c.b16 %v425, %v424
    %v438 = vpack.c.b16 %v427, %v426
    %v439 = vpack.c.b16 %v429, %v428
    %v440 = vpack.c.b16 %v431, %v430
    %v441 = vpack.c.b16 %v433, %v432
    %450 = vmatprep.subr.bf16.mxu0 0
    %451 = vmatpush1.bf16.msra.mxu0 %v434
    %452 = vmatprep.subr.bf16.mxu0 0
    %453 = vmatpush1.bf16.msra.mxu0 %v435
    %454 = vmatprep.subr.bf16.mxu0 0
    %455 = vmatpush1.bf16.msra.mxu0 %v436
    %456 = vmatprep.subr.bf16.mxu0 0
    %457 = vmatpush1.bf16.msra.mxu0 %v437
    %458 = vmatprep.subr.bf16.mxu0 0
    %459 = vmatpush1.bf16.msra.mxu0 %v438
    %460 = vmatprep.subr.bf16.mxu0 0
    %461 = vmatpush1.bf16.msra.mxu0 %v439
    %462 = vmatprep.subr.bf16.mxu0 0
    %463 = vmatpush1.bf16.msra.mxu0 %v440
    %464 = vmatprep.subr.bf16.mxu0 0
    %465 = vmatpush1.bf16.msra.mxu0 %v441
    %466 = vmatprep.subr.bf16.mxu0 0
    %467 = vmatpush1.bf16.msra.mxu0 0
    %468 = vmatprep.subr.bf16.mxu0 0
    %469 = vmatpush1.bf16.msra.mxu0 0
    %470 = vmatprep.subr.bf16.mxu0 0
    %471 = vmatpush1.bf16.msra.mxu0 0
    %472 = vmatprep.subr.bf16.mxu0 0
    %473 = vmatpush1.bf16.msra.mxu0 0
    %474 = vmatprep.subr.bf16.mxu0 0
    %475 = vmatpush1.bf16.msra.mxu0 0
    %476 = vmatprep.subr.bf16.mxu0 0
    %477 = vmatpush1.bf16.msra.mxu0 0
    %478 = vmatprep.subr.bf16.mxu0 0
    %479 = vmatpush1.bf16.msra.mxu0 0
    %480 = vmatprep.subr.bf16.mxu0 0
    %481 = vmatpush1.bf16.msra.mxu0 0
    %482 = vmatprep.mubr.bf16.mxu0 0
    %483 = vmatmul.mubr.bf16.gmra.mrb[0].mxu0 %v383
    %v484 = vpop.f32.mrb[0].mxu0
    %v485 = vadd.f32 %v401, %v484
    %v486 = vpop.f32.mrb[0].mxu0
    %v487 = vpop.f32.mrb[0].mxu0
    %v488 = vpop.f32.mrb[0].mxu0
    %489 = vdwg.mxu0
    %490 = vst [vmem:[#allocation11] sm:$0xff] %v485
    // Predicated region
    $region46: #{tpu_custom_call.1} parent=1 // pred_check
      _
    $region47: #{tpu_custom_call.1} parent=1 // pred_check_branch
      %492 = sbr.rel (0) target = $region49
    $region48: #{tpu_custom_call.1} parent=1 // pred_region
      %s494 = ssub.s32 128, 128
      %495 = vsyncadd [#allocation5], %s494
      %s497 = sshll.u32 [#allocation11], 4
      %s498 = int_to_ptr.vmem [resolvable:$true] %s497
      %500 = dma.vmem_to_hbm [thread:$0]  %s498, 128, %s7, [#allocation5]
    $region49: #{tpu_custom_call.1} parent=1 // pred_fallthru
      _
    // Predicated region
    $region50: #{tpu_custom_call.1} parent=1 // pred_check
      _
    $region51: #{tpu_custom_call.1} parent=1 // pred_check_branch
      %502 = sbr.rel (0) target = $region53
    $region52: #{tpu_custom_call.1} parent=1 // pred_region
      %503 = dma.done [#allocation5], 128
    $region53: #{tpu_custom_call.1} parent=1 // pred_fallthru
      _
    %504 = vsyncpa [#allocation4], 1
    %505 = vsyncpa [#allocation7], 1
    %506 = vsyncpa [#allocation10], 1
    %507 = vsyncpa [#allocation5], 1

</llo_original>
